<compile_context>
chip_gen: v7x
topology: tpu7x:2x2x1
jax: 0.10.0
libtpu: 0.0.40
codegen_flags: <defaults>
</compile_context>

<pallas_src>
import jax
import jax.numpy as jnp
from jax import lax
from jax.experimental import pallas as pl
from jax.experimental.pallas import tpu as pltpu


def _make_basic_head_kernel(c, S, T, n_steps, n_tiles, acc_w, n_groups,
                            rows_per_chunk):
    """Kernel body closed over static shapes.

    acc_w      : accumulator lane width (128 when S % 128 == 0, else S)
    n_groups   : number of acc_w-wide lane groups per tile (S // acc_w)
    rows_per_chunk : channel rows processed per inner chunk (bounds vregs)
    """
    inv_count = 1.0 / float(S * n_tiles)
    single_step = (n_steps == 1)
    n_cc = -(-c // rows_per_chunk)

    def kernel(x_ref, w1a_ref, w1m_ref, b1_ref, w2_ref, b2_ref, o_ref,
               acc_sum_ref, acc_max_ref):
        t_step = pl.program_id(1)

        if not single_step:
            @pl.when(t_step == 0)
            def _init():
                acc_sum_ref[...] = jnp.zeros_like(acc_sum_ref)
                acc_max_ref[...] = jnp.full_like(acc_max_ref, -jnp.inf)

        # ---- hot loop: pure VPU adds/maxes, bounded vreg working set ----
        for ci in range(n_cc):
            r0 = ci * rows_per_chunk
            rows = min(rows_per_chunk, c - r0)
            if single_step:
                # Only one grid step along the reduction axis: init in-regs,
                # skip the scratch read-back.
                s = jnp.zeros((rows, acc_w), jnp.float32)
                m = jnp.full((rows, acc_w), -jnp.inf, jnp.float32)
            else:
                s = acc_sum_ref[pl.ds(r0, rows), :]
                m = acc_max_ref[pl.ds(r0, rows), :]
            for t_local in range(T):          # fused tiles (static unroll)
                for g in range(n_groups):     # 128-lane groups (static unroll)
                    xg = x_ref[t_local, pl.ds(r0, rows),
                               pl.ds(g * acc_w, acc_w)].astype(jnp.float32)
                    s = s + xg
                    m = jnp.maximum(m, xg)
            acc_sum_ref[pl.ds(r0, rows), :] = s
            acc_max_ref[pl.ds(r0, rows), :] = m

        # ---- finalize: one cross-lane reduce + tiny MXU epilogue ----
        @pl.when(t_step == pl.num_programs(1) - 1)
        def _finalize():
            avg_col = jnp.sum(acc_sum_ref[...], axis=-1,
                              keepdims=True) * inv_count            # (c, 1)
            max_col = jnp.max(acc_max_ref[...], axis=-1,
                              keepdims=True)                        # (c, 1)

            # Linear(2c, 512) with W1 pre-split into avg/max halves; contract
            # over the channel axis (axis 0 of both operands) -> (1, 512).
            dn = (((0,), (0,)), ((), ()))
            h = (lax.dot_general(avg_col, w1a_ref[...].astype(jnp.float32), dn,
                                 preferred_element_type=jnp.float32)
                 + lax.dot_general(max_col, w1m_ref[...].astype(jnp.float32), dn,
                                   preferred_element_type=jnp.float32)
                 + b1_ref[...])                                     # (1, 512)

            # Mish: x * tanh(softplus(x)); Dropout layers are identity (eval).
            h = h * jnp.tanh(jnp.logaddexp(h, 0.0))

            # Eval-mode BatchNorm folded into w2/b2 on the host.
            out = (jnp.dot(h, w2_ref[...].astype(jnp.float32),
                           preferred_element_type=jnp.float32)
                   + b2_ref[...])                                   # (1, c_out)
            o_ref[0] = out.astype(o_ref.dtype)

    return kernel


def _vmem_capacity_bytes():
    """Physical per-core VMEM; conservative fallback = v7x's 64 MiB."""
    try:
        info = pltpu.get_tpu_info()
        cap = getattr(info, "vmem_capacity_bytes", None)
        if cap:
            return int(cap)
    except Exception:
        pass
    return 64 << 20


def basic_head_forward(x, params, n_tiles, x_dtype=None):
    """x: (bn, c, H, W) NCHW, bn = B * n_tiles. Returns (B, c_out) f32.

    x_dtype: optionally cast activations once (e.g. jnp.bfloat16) — the kernel
    is HBM-bandwidth-bound, so bf16 roughly halves wall-clock; accumulation is
    always f32.
    """
    bn, c, H, W = x.shape
    assert bn % n_tiles == 0
    B = bn // n_tiles
    S = H * W

    # Contiguous reshape only (no transpose, no extra HBM copy of x).
    xr = x.reshape(bn, c, S)
    if x_dtype is not None and xr.dtype != x_dtype:
        xr = xr.astype(x_dtype)

    w1, b1, gamma, beta, rm, rv, w2, b2 = params
    assert w1.shape[0] == 2 * c
    hidden = w1.shape[1]
    c_out = w2.shape[1]

    # One-off host-side parameter prep (tiny):
    #  * split W1 into avg / max row halves
    #  * fold eval-mode BatchNorm into W2 / b2 (exact: BN sits between Mish and Linear2)
    w1a = w1[:c, :]
    w1m = w1[c:, :]
    scale = gamma * lax.rsqrt(rv + 1e-5)                 # (1, hidden)
    w2f = w2 * scale.reshape(hidden, 1)                  # (hidden, c_out)
    b2f = b2 + (beta - rm * scale) @ w2                  # (1, c_out)

    # --- accumulation layout (no XLU in the hot loop, ever) ---
    if S % 128 == 0:
        acc_w, n_groups = 128, S // 128                  # fold 128-lane groups
    else:
        acc_w, n_groups = S, 1                           # ragged / small S: full width
    lane_tiles = -(-acc_w // 128)
    rows_per_chunk = max(8, (64 // max(lane_tiles, 1)) // 8 * 8)
    rows_per_chunk = min(rows_per_chunk, c)
    if c < 8:
        rows_per_chunk = c
    n_cc = -(-c // rows_per_chunk)

    # --- generation-aware VMEM budget and tile-fusion factor T ---
    itemsize = jnp.dtype(xr.dtype).itemsize
    tile_bytes = c * S * itemsize
    param_bytes = sum(int(p.size) * jnp.dtype(p.dtype).itemsize
                      for p in (w1a, w1m, b1, w2f, b2f))
    scratch_bytes = 2 * c * acc_w * 4
    fixed_bytes = 2 * param_bytes + scratch_bytes + 2 * c_out * 4 + (4 << 20)

    vmem_budget = int(_vmem_capacity_bytes() * 0.75)     # ~48 MiB v7x, ~96 MiB v5e/v6e
    x_budget = max(vmem_budget - fixed_bytes, 2 * tile_bytes)

    T = 1
    for cand in range(n_tiles, 0, -1):
        if n_tiles % cand:
            continue
        if 2 * cand * tile_bytes > x_budget:             # double-buffered x block
            continue
        if cand * n_groups * n_cc > 1024 and cand > 1:   # keep unrolled body sane
            continue
        T = cand
        break
    n_steps = n_tiles // T

    needed = 2 * T * tile_bytes + fixed_bytes
    vmem_limit = int(max(min(max(int(needed * 1.25), 32 << 20), vmem_budget),
                         needed))

    grid = (B, n_steps)
    kernel = _make_basic_head_kernel(c, S, T, n_steps, n_tiles, acc_w,
                                     n_groups, rows_per_chunk)

    out = pl.pallas_call(
        kernel,
        out_shape=jax.ShapeDtypeStruct((B, 1, c_out), jnp.float32),
        grid_spec=pltpu.PrefetchScalarGridSpec(
            num_scalar_prefetch=0,
            grid=grid,
            in_specs=[
                # x: T fused tiles (full C, full S) per grid step.
                pl.BlockSpec((T, c, S), lambda b, t: (b * n_steps + t, 0, 0)),
                # Weights / biases: constant block index -> stay VMEM-resident.
                pl.BlockSpec((c, hidden), lambda b, t: (0, 0)),
                pl.BlockSpec((c, hidden), lambda b, t: (0, 0)),
                pl.BlockSpec((1, hidden), lambda b, t: (0, 0)),
                pl.BlockSpec((hidden, c_out), lambda b, t: (0, 0)),
                pl.BlockSpec((1, c_out), lambda b, t: (0, 0)),
            ],
            out_specs=pl.BlockSpec((1, 1, c_out), lambda b, t: (b, 0, 0)),
            scratch_shapes=[pltpu.VMEM((c, acc_w), jnp.float32),
                            pltpu.VMEM((c, acc_w), jnp.float32)],
        ),
        compiler_params=pltpu.CompilerParams(
            # B axis parallel (sharded across both TensorCores on v7x megacore),
            # tile-step axis is the running reduction.
            dimension_semantics=("parallel", "arbitrary"),
            vmem_limit_bytes=vmem_limit,
        ),
    )(xr, w1a, w1m, b1, w2f, b2f)
    return out.reshape(B, c_out)


def _reference_forward(x, params, n_tiles):
    """Pure-JAX reference (uses the original, un-folded parameters)."""
    bn, c, H, W = x.shape
    B = bn // n_tiles
    xr = (x.reshape(B, n_tiles, c, H, W)
            .transpose(0, 2, 1, 3, 4)
            .reshape(B, c, n_tiles * H * W)
            .astype(jnp.float32))
    w1, b1, gamma, beta, rm, rv, w2, b2 = params
    feat = jnp.concatenate([jnp.mean(xr, -1), jnp.max(xr, -1)], axis=1)  # (B, 2c)
    h = feat @ w1 + b1
    h = h * jnp.tanh(jnp.logaddexp(h, 0.0))
    h = (h - rm) / jnp.sqrt(rv + 1e-5) * gamma + beta
    return h @ w2 + b2


def make_params(key, c_in, c_out, hidden=512):
    ks = jax.random.split(key, 8)
    w1 = jax.random.normal(ks[0], (2 * c_in, hidden), jnp.float32) * 0.05
    b1 = jax.random.normal(ks[1], (1, hidden), jnp.float32) * 0.01
    gamma = 1.0 + jax.random.normal(ks[2], (1, hidden), jnp.float32) * 0.1
    beta = jax.random.normal(ks[3], (1, hidden), jnp.float32) * 0.1
    rm = jax.random.normal(ks[4], (1, hidden), jnp.float32) * 0.05
    rv = 1.0 + jax.random.uniform(ks[5], (1, hidden), jnp.float32) * 0.1
    w2 = jax.random.normal(ks[6], (hidden, c_out), jnp.float32) * 0.05
    b2 = jax.random.normal(ks[7], (1, c_out), jnp.float32) * 0.01
    return (w1, b1, gamma, beta, rm, rv, w2, b2)


if __name__ == "__main__":
    key = jax.random.PRNGKey(0)
    k_x, k_p = jax.random.split(key)

    B, n_tiles, c_in, H, W = 2, 4, 8, 16, 16
    c_out = 6
    bn = B * n_tiles

    x = jax.random.normal(k_x, (bn, c_in, H, W), jnp.float32)
    params = make_params(k_p, c_in, c_out)

    ref = _reference_forward(x, params, n_tiles)

    # f32 activations: exact-path check.
    out_f32 = jax.block_until_ready(basic_head_forward(x, params, n_tiles))
    assert out_f32.shape == (B, c_out)
    assert jnp.allclose(out_f32, ref, rtol=1e-4, atol=1e-4), "f32 mismatch vs reference"

    # bf16 activations (halves HBM traffic of the only large operand);
    # accumulation stays f32 — looser tolerance vs the f32 reference.
    out_bf16 = jax.block_until_ready(
        basic_head_forward(x, params, n_tiles, x_dtype=jnp.bfloat16))
    assert out_bf16.shape == (B, c_out)
    assert jnp.allclose(out_bf16, ref, rtol=3e-2, atol=3e-2), "bf16 mismatch vs reference"

    print("KERNEL_OK")
</pallas_src>

<mosaic_0001>
module attributes {stable_mosaic.version = 11 : i64} {
  func.func @kernel(%arg0: i32, %arg1: i32, %arg2: memref<4x8x256xf32, #tpu.memory_space<vmem>>, %arg3: memref<8x512xf32, #tpu.memory_space<vmem>>, %arg4: memref<8x512xf32, #tpu.memory_space<vmem>>, %arg5: memref<1x512xf32, #tpu.memory_space<vmem>>, %arg6: memref<512x6xf32, #tpu.memory_space<vmem>>, %arg7: memref<1x6xf32, #tpu.memory_space<vmem>>, %arg8: memref<1x1x6xf32, #tpu.memory_space<vmem>>, %arg9: memref<8x128xf32, #tpu.memory_space<vmem>>, %arg10: memref<8x128xf32, #tpu.memory_space<vmem>>) attributes {dimension_semantics = [#tpu.dimension_semantics<parallel>, #tpu.dimension_semantics<arbitrary>], iteration_bounds = array<i64: 2, 1>, scalar_prefetch = 0 : i64, scratch_operands = 2 : i64, tpu.core_type = #tpu.core_type<tc>, window_params = [{transform_indices = @transform_0, window_bounds = array<i64: 4, 8, 256>}, {pipeline_mode = #tpu.pipeline_mode<synchronous>, transform_indices = @transform_1, window_bounds = array<i64: 8, 512>}, {pipeline_mode = #tpu.pipeline_mode<synchronous>, transform_indices = @transform_2, window_bounds = array<i64: 8, 512>}, {pipeline_mode = #tpu.pipeline_mode<synchronous>, transform_indices = @transform_3, window_bounds = array<i64: 1, 512>}, {pipeline_mode = #tpu.pipeline_mode<synchronous>, transform_indices = @transform_4, window_bounds = array<i64: 512, 6>}, {pipeline_mode = #tpu.pipeline_mode<synchronous>, transform_indices = @transform_5, window_bounds = array<i64: 1, 6>}, {transform_indices = @transform_6, window_bounds = array<i64: 1, 1, 6>}]} {
    %cst = arith.constant 0.000000e+00 : f32
    %0 = vector.broadcast %cst : f32 to vector<8x128xf32>
    %cst_0 = arith.constant 0xFF800000 : f32
    %1 = vector.broadcast %cst_0 : f32 to vector<8x128xf32>
    %c0 = arith.constant 0 : index
    %c0_1 = arith.constant 0 : index
    %c0_2 = arith.constant 0 : index
    %2 = vector.load %arg2[%c0, %c0_1, %c0_2] : memref<4x8x256xf32, #tpu.memory_space<vmem>>, vector<1x8x128xf32>
    %3 = vector.shape_cast %2 : vector<1x8x128xf32> to vector<8x128xf32>
    %4 = arith.addf %0, %3 : vector<8x128xf32>
    %5 = arith.maximumf %1, %3 : vector<8x128xf32>
    %c0_3 = arith.constant 0 : index
    %c0_4 = arith.constant 0 : index
    %c128 = arith.constant 128 : index
    %6 = vector.load %arg2[%c0_3, %c0_4, %c128] : memref<4x8x256xf32, #tpu.memory_space<vmem>>, vector<1x8x128xf32>
    %7 = vector.shape_cast %6 : vector<1x8x128xf32> to vector<8x128xf32>
    %8 = arith.addf %4, %7 : vector<8x128xf32>
    %9 = arith.maximumf %5, %7 : vector<8x128xf32>
    %c1 = arith.constant 1 : index
    %c0_5 = arith.constant 0 : index
    %c0_6 = arith.constant 0 : index
    %10 = vector.load %arg2[%c1, %c0_5, %c0_6] : memref<4x8x256xf32, #tpu.memory_space<vmem>>, vector<1x8x128xf32>
    %11 = vector.shape_cast %10 : vector<1x8x128xf32> to vector<8x128xf32>
    %12 = arith.addf %8, %11 : vector<8x128xf32>
    %13 = arith.maximumf %9, %11 : vector<8x128xf32>
    %c1_7 = arith.constant 1 : index
    %c0_8 = arith.constant 0 : index
    %c128_9 = arith.constant 128 : index
    %14 = vector.load %arg2[%c1_7, %c0_8, %c128_9] : memref<4x8x256xf32, #tpu.memory_space<vmem>>, vector<1x8x128xf32>
    %15 = vector.shape_cast %14 : vector<1x8x128xf32> to vector<8x128xf32>
    %16 = arith.addf %12, %15 : vector<8x128xf32>
    %17 = arith.maximumf %13, %15 : vector<8x128xf32>
    %c2 = arith.constant 2 : index
    %c0_10 = arith.constant 0 : index
    %c0_11 = arith.constant 0 : index
    %18 = vector.load %arg2[%c2, %c0_10, %c0_11] : memref<4x8x256xf32, #tpu.memory_space<vmem>>, vector<1x8x128xf32>
    %19 = vector.shape_cast %18 : vector<1x8x128xf32> to vector<8x128xf32>
    %20 = arith.addf %16, %19 : vector<8x128xf32>
    %21 = arith.maximumf %17, %19 : vector<8x128xf32>
    %c2_12 = arith.constant 2 : index
    %c0_13 = arith.constant 0 : index
    %c128_14 = arith.constant 128 : index
    %22 = vector.load %arg2[%c2_12, %c0_13, %c128_14] : memref<4x8x256xf32, #tpu.memory_space<vmem>>, vector<1x8x128xf32>
    %23 = vector.shape_cast %22 : vector<1x8x128xf32> to vector<8x128xf32>
    %24 = arith.addf %20, %23 : vector<8x128xf32>
    %25 = arith.maximumf %21, %23 : vector<8x128xf32>
    %c3 = arith.constant 3 : index
    %c0_15 = arith.constant 0 : index
    %c0_16 = arith.constant 0 : index
    %26 = vector.load %arg2[%c3, %c0_15, %c0_16] : memref<4x8x256xf32, #tpu.memory_space<vmem>>, vector<1x8x128xf32>
    %27 = vector.shape_cast %26 : vector<1x8x128xf32> to vector<8x128xf32>
    %28 = arith.addf %24, %27 : vector<8x128xf32>
    %29 = arith.maximumf %25, %27 : vector<8x128xf32>
    %c3_17 = arith.constant 3 : index
    %c0_18 = arith.constant 0 : index
    %c128_19 = arith.constant 128 : index
    %30 = vector.load %arg2[%c3_17, %c0_18, %c128_19] : memref<4x8x256xf32, #tpu.memory_space<vmem>>, vector<1x8x128xf32>
    %31 = vector.shape_cast %30 : vector<1x8x128xf32> to vector<8x128xf32>
    %32 = arith.addf %28, %31 : vector<8x128xf32>
    %33 = arith.maximumf %29, %31 : vector<8x128xf32>
    %c0_20 = arith.constant 0 : index
    %c0_21 = arith.constant 0 : index
    %34 = vector.load %arg9[%c0_20, %c0_21] : memref<8x128xf32, #tpu.memory_space<vmem>>, vector<8x128xf32>
    tpu.vector_store %arg9[%c0_20, %c0_21], %32 {strides = array<i32>} : memref<8x128xf32, #tpu.memory_space<vmem>>, vector<8x128xf32>,
    %c0_22 = arith.constant 0 : index
    %c0_23 = arith.constant 0 : index
    %35 = vector.load %arg10[%c0_22, %c0_23] : memref<8x128xf32, #tpu.memory_space<vmem>>, vector<8x128xf32>
    tpu.vector_store %arg10[%c0_22, %c0_23], %33 {strides = array<i32>} : memref<8x128xf32, #tpu.memory_space<vmem>>, vector<8x128xf32>,
    %c0_i32 = arith.constant 0 : i32
    %36 = arith.cmpi eq, %arg1, %c0_i32 : i32
    %37 = arith.extui %36 : i1 to i32
    %c0_i32_24 = arith.constant 0 : i32
    %38 = arith.cmpi ne, %37, %c0_i32_24 : i32
    scf.if %38 {
      %c0_25 = arith.constant 0 : index
      %c0_26 = arith.constant 0 : index
      %39 = vector.load %arg9[%c0_25, %c0_26] : memref<8x128xf32, #tpu.memory_space<vmem>>, vector<8x128xf32>
      %cst_27 = arith.constant dense<0.000000e+00> : vector<8xf32>
      %40 = vector.multi_reduction <add>, %39, %cst_27 [1] : vector<8x128xf32> to vector<8xf32>
      %41 = vector.shape_cast %40 : vector<8xf32> to vector<8x1xf32>
      %cst_28 = arith.constant 9.765625E-4 : f32
      %42 = vector.broadcast %cst_28 : f32 to vector<8x1xf32>
      %43 = arith.mulf %41, %42 : vector<8x1xf32>
      %c0_29 = arith.constant 0 : index
      %c0_30 = arith.constant 0 : index
      %44 = vector.load %arg10[%c0_29, %c0_30] : memref<8x128xf32, #tpu.memory_space<vmem>>, vector<8x128xf32>
      %cst_31 = arith.constant dense<0xFF800000> : vector<8xf32>
      %45 = vector.multi_reduction <maximumf>, %44, %cst_31 [1] : vector<8x128xf32> to vector<8xf32>
      %46 = vector.shape_cast %45 : vector<8xf32> to vector<8x1xf32>
      %c0_32 = arith.constant 0 : index
      %c0_33 = arith.constant 0 : index
      %47 = vector.load %arg3[%c0_32, %c0_33] : memref<8x512xf32, #tpu.memory_space<vmem>>, vector<8x512xf32>
      %cst_34 = arith.constant dense<0.000000e+00> : vector<1x512xf32>
      %48 = tpu.matmul %43, %47, %cst_34 {dimension_numbers = #tpu.dot_dimension_numbers<[0], [0], [1], [1], [0, 1, 1, 1], [], []>} : vector<8x1xf32>, vector<8x512xf32>, vector<1x512xf32> -> vector<1x512xf32>
      %c0_35 = arith.constant 0 : index
      %c0_36 = arith.constant 0 : index
      %49 = vector.load %arg4[%c0_35, %c0_36] : memref<8x512xf32, #tpu.memory_space<vmem>>, vector<8x512xf32>
      %cst_37 = arith.constant dense<0.000000e+00> : vector<1x512xf32>
      %50 = tpu.matmul %46, %49, %cst_37 {dimension_numbers = #tpu.dot_dimension_numbers<[0], [0], [1], [1], [0, 1, 1, 1], [], []>} : vector<8x1xf32>, vector<8x512xf32>, vector<1x512xf32> -> vector<1x512xf32>
      %51 = arith.addf %48, %50 : vector<1x512xf32>
      %c0_38 = arith.constant 0 : index
      %c0_39 = arith.constant 0 : index
      %52 = vector.load %arg5[%c0_38, %c0_39] : memref<1x512xf32, #tpu.memory_space<vmem>>, vector<1x512xf32>
      %53 = arith.addf %51, %52 : vector<1x512xf32>
      %cst_40 = arith.constant 0.000000e+00 : f32
      %54 = vector.broadcast %cst_40 : f32 to vector<1x512xf32>
      %55 = arith.maximumf %53, %54 : vector<1x512xf32>
      %56 = vector.broadcast %cst_40 : f32 to vector<1x512xf32>
      %57 = arith.subf %53, %56 : vector<1x512xf32>
      %58 = arith.cmpf one, %57, %57 : vector<1x512xf32>
      %59 = vector.broadcast %cst_40 : f32 to vector<1x512xf32>
      %60 = arith.addf %53, %59 : vector<1x512xf32>
      %61 = math.absf %57 : vector<1x512xf32>
      %cst_41 = arith.constant 0.000000e+00 : f32
      %62 = vector.broadcast %cst_41 : f32 to vector<1x512xf32>
      %63 = arith.subf %62, %61 : vector<1x512xf32>
      %64 = math.exp %63 : vector<1x512xf32>
      %65 = math.log1p %64 : vector<1x512xf32>
      %66 = arith.addf %55, %65 : vector<1x512xf32>
      %67 = arith.select %58, %60, %66 : vector<1x512xi1>, vector<1x512xf32>
      %68 = math.tanh %67 : vector<1x512xf32>
      %69 = arith.mulf %53, %68 : vector<1x512xf32>
      %c0_42 = arith.constant 0 : index
      %c0_43 = arith.constant 0 : index
      %70 = vector.load %arg6[%c0_42, %c0_43] : memref<512x6xf32, #tpu.memory_space<vmem>>, vector<512x6xf32>
      %cst_44 = arith.constant dense<0.000000e+00> : vector<1x6xf32>
      %71 = tpu.matmul %69, %70, %cst_44 {dimension_numbers = #tpu.dot_dimension_numbers<[1], [0], [0], [1], [0, 0, 1, 1], [], []>} : vector<1x512xf32>, vector<512x6xf32>, vector<1x6xf32> -> vector<1x6xf32>
      %c0_45 = arith.constant 0 : index
      %c0_46 = arith.constant 0 : index
      %72 = vector.load %arg7[%c0_45, %c0_46] : memref<1x6xf32, #tpu.memory_space<vmem>>, vector<1x6xf32>
      %73 = arith.addf %71, %72 : vector<1x6xf32>
      %c0_47 = arith.constant 0 : index
      %c0_48 = arith.constant 0 : index
      %c0_49 = arith.constant 0 : index
      %74 = vector.load %arg8[%c0_47, %c0_48, %c0_49] : memref<1x1x6xf32, #tpu.memory_space<vmem>>, vector<1x1x6xf32>
      %75 = vector.shape_cast %74 : vector<1x1x6xf32> to vector<1x6xf32>
      %76 = vector.shape_cast %73 : vector<1x6xf32> to vector<1x1x6xf32>
      tpu.vector_store %arg8[%c0_47, %c0_48, %c0_49], %76 {strides = array<i32>} : memref<1x1x6xf32, #tpu.memory_space<vmem>>, vector<1x1x6xf32>,
    } else {
    }
    return
  }
  func.func @transform_0(%arg0: i32, %arg1: i32) -> (i32, i32, i32) {
    %c1_i32 = arith.constant 1 : i32
    %0 = arith.muli %arg0, %c1_i32 : i32
    %1 = arith.addi %0, %arg1 : i32
    %c0_i32 = arith.constant 0 : i32
    %c0_i32_0 = arith.constant 0 : i32
    %c0_i32_1 = arith.constant 0 : i32
    return %1, %c0_i32, %c0_i32_0 : i32, i32, i32
  }
  func.func @transform_1(%arg0: i32, %arg1: i32) -> (i32, i32) {
    %c0_i32 = arith.constant 0 : i32
    %c0_i32_0 = arith.constant 0 : i32
    %c0_i32_1 = arith.constant 0 : i32
    return %c0_i32, %c0_i32_0 : i32, i32
  }
  func.func @transform_2(%arg0: i32, %arg1: i32) -> (i32, i32) {
    %c0_i32 = arith.constant 0 : i32
    %c0_i32_0 = arith.constant 0 : i32
    %c0_i32_1 = arith.constant 0 : i32
    return %c0_i32, %c0_i32_0 : i32, i32
  }
  func.func @transform_3(%arg0: i32, %arg1: i32) -> (i32, i32) {
    %c0_i32 = arith.constant 0 : i32
    %c0_i32_0 = arith.constant 0 : i32
    %c0_i32_1 = arith.constant 0 : i32
    return %c0_i32, %c0_i32_0 : i32, i32
  }
  func.func @transform_4(%arg0: i32, %arg1: i32) -> (i32, i32) {
    %c0_i32 = arith.constant 0 : i32
    %c0_i32_0 = arith.constant 0 : i32
    %c0_i32_1 = arith.constant 0 : i32
    return %c0_i32, %c0_i32_0 : i32, i32
  }
  func.func @transform_5(%arg0: i32, %arg1: i32) -> (i32, i32) {
    %c0_i32 = arith.constant 0 : i32
    %c0_i32_0 = arith.constant 0 : i32
    %c0_i32_1 = arith.constant 0 : i32
    return %c0_i32, %c0_i32_0 : i32, i32
  }
  func.func @transform_6(%arg0: i32, %arg1: i32) -> (i32, i32, i32) {
    %c0_i32 = arith.constant 0 : i32
    %c0_i32_0 = arith.constant 0 : i32
    %c0_i32_1 = arith.constant 0 : i32
    return %arg0, %c0_i32, %c0_i32_0 : i32, i32, i32
  }
}

</mosaic_0001>

<llo_original>
// kernel: tpu_custom_call.1
$region0: #{tpu_custom_call.1}
  #allocation0 [shape = 'u32[]', space=smem, size = 0x4, offset = 0x4, fixed_abs, tag = 'smem constant byte address 0x4 - core index']
  #allocation1 [shape = 'u32[144,128]{1,0:T(1,128)}', space=vmem, size = 0x12000, scoped, tag = 'internal scratch']
  #allocation2 [shape = 'f32[8,128]{1,0:T(8,128)}', space=vmem, size = 0x1000, scoped, tag = 'scratch operand']
  #allocation3 [shape = 'f32[8,128]{1,0:T(8,128)}', space=vmem, size = 0x1000, scoped, tag = 'scratch operand']
  %s0 = inlined_call_operand.vmem [shape: f32[8,8,256], index: 0, kind: input, shape index: {}]
  %s1 = inlined_call_operand.vmem [shape: f32[8,512], index: 1, kind: input, shape index: {}]
  %s2 = inlined_call_operand.vmem [shape: f32[8,512], index: 2, kind: input, shape index: {}]
  %s3 = inlined_call_operand.vmem [shape: f32[1,512], index: 3, kind: input, shape index: {}]
  %s4 = inlined_call_operand.vmem [shape: f32[512,6], index: 4, kind: input, shape index: {}]
  %s5 = inlined_call_operand.vmem [shape: f32[1,6], index: 5, kind: input, shape index: {}]
  %s6 = inlined_call_operand.hbm [shape: f32[2,1,6], index: 6, kind: output, shape index: {}]
  %s7 = sld [smem:[#allocation0]]
  $region61: #{tpu_custom_call.1} parent=0
    _
  %s9 = ssub.s32 1, %s7
  %s10 = scalar_select 0, %s9, %s7
  $region1: #{tpu_custom_call.1} parent=0
    #allocation4 [shape = 'u8[1024]{0}', space=vmem, size = 0x400, scoped, tag = 'output window, operand 0']
    #allocation5 [shape = 's32[2]{0}', space=sflag, size = 0x8, scoped, tag = 'scoped memory for tpu_custom_call.1']
    %11 = vsyncpa [#allocation5], 0
    %s12 = scalar_lea.sflag [#allocation5], 1
    %13 = vsyncpa %s12, 0
    loop: start=0, step=1, limit=4
    $region2: #{tpu_custom_call.1} parent=1 // loop_pre_header
      _
    $region3: #{tpu_custom_call.1} parent=1 // loop_header
      %s15 = sphi 0, %s19
      %p16 = scmp.ge.s32.totalorder %s15, 4
      %s22 = sphi 0, %s34
      %s23 = sphi 0, %s30
      %s24 = sphi 0, %s22
      %s25 = sphi 0, %s23
      %s26 = sphi 0, %s24
      %s27 = sphi 0, %s25
      %s39 = sphi 0, %s41
      %s42 = sphi 0, %s39
      %s43 = sphi 0, %s42
      %s59 = sphi 0, %s43
      %s63 = sphi 0, %s63
      %s65 = sphi 0, %s63
      %s66 = sphi 0, %s65
      %s80 = sphi 0, %s66
      %s84 = sphi 0, %s84
      %s86 = sphi 0, %s84
      %s87 = sphi 0, %s86
      %s101 = sphi 0, %s87
      %s105 = sphi 0, %s105
      %s107 = sphi 0, %s105
      %s108 = sphi 0, %s107
      %s122 = sphi 0, %s108
      %s126 = sphi 0, %s126
      %s128 = sphi 0, %s126
      %s129 = sphi 0, %s128
      %s143 = sphi 0, %s129
      %s147 = sphi 0, %s147
      %s149 = sphi 0, %s147
      %s150 = sphi 0, %s149
      %s164 = sphi 0, %s150
      %s170 = sphi 0, %s172
      %s173 = sphi 0, %s170
      %s174 = sphi 0, %s173
      %s190 = sphi 0, %s174
    $region4: #{tpu_custom_call.1} parent=1 // loop_header_branch
      %18 = sbr.rel (%p16) target = $region8
    $region5: #{tpu_custom_call.1} parent=1 // loop_body
      %s20 = ssub.s32 %s15, 1
      %s21 = ssub.s32 %s15, 2
      %s28 = sadd.s32 1, %s23
      %p29 = scmp.ge.s32.totalorder %s28, 1
      %s30 = scalar_select %p29, 0, %s28
      %s31 = sadd.s32 1, %s22
      %s32 = scalar_select %p29, %s31, %s22
      %p33 = scmp.ge.s32.totalorder %s32, 2
      %s34 = scalar_select %p33, 0, %s32
      %s35 = sadd.s32 %s22, %s23
      %s36 = sadd.s32 %s34, %s30
      %s37 = ssub.s32 %s35, %s36
      %p38 = scmp.eq.s32.totalorder %s37, 0
      %s40 = sadd.s32 %s39, 1
      %s41 = scalar_select %p38, %s39, %s40
      %p44 = pneg %p38
      %p45 = scmp.eq.s32.totalorder %s15, 1
      %p46 = por %p44, %p45
      %p47 = scmp.ne.s32.totalorder %s39, %s42
      %p48 = scmp.eq.s32.totalorder %s15, 0
      %p49 = por %p47, %p48
      %p50 = scmp.ne.s32.totalorder %s39, %s42
      %p51 = scmp.eq.s32.totalorder %s20, 1
      %p52 = por %p50, %p51
      %p53 = scmp.ne.s32.totalorder %s42, %s43
      %p54 = scmp.eq.s32.totalorder %s20, 0
      %p55 = por %p53, %p54
      %p56 = scmp.ne.s32.totalorder %s42, %s43
      %p57 = scmp.eq.s32.totalorder %s21, 1
      %p58 = por %p56, %p57
      %p60 = scmp.ne.s32.totalorder %s43, %s59
      %p61 = scmp.eq.s32.totalorder %s21, 0
      %p62 = por %p60, %p61
      %s64 = sadd.s32 %s63, 1
      %p67 = scmp.eq.s32.totalorder %s15, 1
      %p68 = scmp.ne.s32.totalorder %s63, %s65
      %p69 = scmp.eq.s32.totalorder %s15, 0
      %p70 = por %p68, %p69
      %p71 = scmp.ne.s32.totalorder %s63, %s65
      %p72 = scmp.eq.s32.totalorder %s20, 1
      %p73 = por %p71, %p72
      %p74 = scmp.ne.s32.totalorder %s65, %s66
      %p75 = scmp.eq.s32.totalorder %s20, 0
      %p76 = por %p74, %p75
      %p77 = scmp.ne.s32.totalorder %s65, %s66
      %p78 = scmp.eq.s32.totalorder %s21, 1
      %p79 = por %p77, %p78
      %p81 = scmp.ne.s32.totalorder %s66, %s80
      %p82 = scmp.eq.s32.totalorder %s21, 0
      %p83 = por %p81, %p82
      %s85 = sadd.s32 %s84, 1
      %p88 = scmp.eq.s32.totalorder %s15, 1
      %p89 = scmp.ne.s32.totalorder %s84, %s86
      %p90 = scmp.eq.s32.totalorder %s15, 0
      %p91 = por %p89, %p90
      %p92 = scmp.ne.s32.totalorder %s84, %s86
      %p93 = scmp.eq.s32.totalorder %s20, 1
      %p94 = por %p92, %p93
      %p95 = scmp.ne.s32.totalorder %s86, %s87
      %p96 = scmp.eq.s32.totalorder %s20, 0
      %p97 = por %p95, %p96
      %p98 = scmp.ne.s32.totalorder %s86, %s87
      %p99 = scmp.eq.s32.totalorder %s21, 1
      %p100 = por %p98, %p99
      %p102 = scmp.ne.s32.totalorder %s87, %s101
      %p103 = scmp.eq.s32.totalorder %s21, 0
      %p104 = por %p102, %p103
      %s106 = sadd.s32 %s105, 1
      %p109 = scmp.eq.s32.totalorder %s15, 1
      %p110 = scmp.ne.s32.totalorder %s105, %s107
      %p111 = scmp.eq.s32.totalorder %s15, 0
      %p112 = por %p110, %p111
      %p113 = scmp.ne.s32.totalorder %s105, %s107
      %p114 = scmp.eq.s32.totalorder %s20, 1
      %p115 = por %p113, %p114
      %p116 = scmp.ne.s32.totalorder %s107, %s108
      %p117 = scmp.eq.s32.totalorder %s20, 0
      %p118 = por %p116, %p117
      %p119 = scmp.ne.s32.totalorder %s107, %s108
      %p120 = scmp.eq.s32.totalorder %s21, 1
      %p121 = por %p119, %p120
      %p123 = scmp.ne.s32.totalorder %s108, %s122
      %p124 = scmp.eq.s32.totalorder %s21, 0
      %p125 = por %p123, %p124
      %s127 = sadd.s32 %s126, 1
      %p130 = scmp.eq.s32.totalorder %s15, 1
      %p131 = scmp.ne.s32.totalorder %s126, %s128
      %p132 = scmp.eq.s32.totalorder %s15, 0
      %p133 = por %p131, %p132
      %p134 = scmp.ne.s32.totalorder %s126, %s128
      %p135 = scmp.eq.s32.totalorder %s20, 1
      %p136 = por %p134, %p135
      %p137 = scmp.ne.s32.totalorder %s128, %s129
      %p138 = scmp.eq.s32.totalorder %s20, 0
      %p139 = por %p137, %p138
      %p140 = scmp.ne.s32.totalorder %s128, %s129
      %p141 = scmp.eq.s32.totalorder %s21, 1
      %p142 = por %p140, %p141
      %p144 = scmp.ne.s32.totalorder %s129, %s143
      %p145 = scmp.eq.s32.totalorder %s21, 0
      %p146 = por %p144, %p145
      %s148 = sadd.s32 %s147, 1
      %p151 = scmp.eq.s32.totalorder %s15, 1
      %p152 = scmp.ne.s32.totalorder %s147, %s149
      %p153 = scmp.eq.s32.totalorder %s15, 0
      %p154 = por %p152, %p153
      %p155 = scmp.ne.s32.totalorder %s147, %s149
      %p156 = scmp.eq.s32.totalorder %s20, 1
      %p157 = por %p155, %p156
      %p158 = scmp.ne.s32.totalorder %s149, %s150
      %p159 = scmp.eq.s32.totalorder %s20, 0
      %p160 = por %p158, %p159
      %p161 = scmp.ne.s32.totalorder %s149, %s150
      %p162 = scmp.eq.s32.totalorder %s21, 1
      %p163 = por %p161, %p162
      %p165 = scmp.ne.s32.totalorder %s150, %s164
      %p166 = scmp.eq.s32.totalorder %s21, 0
      %p167 = por %p165, %p166
      %s168 = ssub.s32 %s22, %s34
      %p169 = scmp.eq.s32.totalorder %s168, 0
      %s171 = sadd.s32 %s170, 1
      %s172 = scalar_select %p169, %s170, %s171
      %p175 = pneg %p169
      %p176 = scmp.eq.s32.totalorder %s15, 1
      %p177 = por %p175, %p176
      %p178 = scmp.ne.s32.totalorder %s170, %s173
      %p179 = scmp.eq.s32.totalorder %s15, 0
      %p180 = por %p178, %p179
      %p181 = scmp.ne.s32.totalorder %s170, %s173
      %p182 = scmp.eq.s32.totalorder %s20, 1
      %p183 = por %p181, %p182
      %p184 = scmp.ne.s32.totalorder %s173, %s174
      %p185 = scmp.eq.s32.totalorder %s20, 0
      %p186 = por %p184, %p185
      %p187 = scmp.ne.s32.totalorder %s173, %s174
      %p188 = scmp.eq.s32.totalorder %s21, 1
      %p189 = por %p187, %p188
      %p191 = scmp.ne.s32.totalorder %s174, %s190
      %p192 = scmp.eq.s32.totalorder %s21, 0
      %p193 = por %p191, %p192
      %p194 = scmp.le.s32.totalorder 1, %s15
      %p195 = scmp.lt.s32.totalorder %s15, 3
      %p196 = pnand %p194, %p195
      %p197 = pneg %p196
      // Predicated region
      $region9: #{tpu_custom_call.1} parent=5 // pred_check
        _
      $region10: #{tpu_custom_call.1} parent=5 // pred_check_branch
        %199 = sbr.rel (%p196) target = $region12
      $region11: #{tpu_custom_call.1} parent=5 // pred_region
        %s200 = ssub.s32 %s15, 1
        // Predicated region
        $region13: #{tpu_custom_call.1} parent=11 // pred_check
          %p201 = pneg %p76
        $region14: #{tpu_custom_call.1} parent=11 // pred_check_branch
          %203 = sbr.rel (%p201) target = $region16
        $region15: #{tpu_custom_call.1} parent=11 // pred_region
          _
        $region16: #{tpu_custom_call.1} parent=11 // pred_fallthru
          _
        // Predicated region
        $region17: #{tpu_custom_call.1} parent=11 // pred_check
          %p204 = pneg %p97
        $region18: #{tpu_custom_call.1} parent=11 // pred_check_branch
          %206 = sbr.rel (%p204) target = $region20
        $region19: #{tpu_custom_call.1} parent=11 // pred_region
          _
        $region20: #{tpu_custom_call.1} parent=11 // pred_fallthru
          _
        // Predicated region
        $region21: #{tpu_custom_call.1} parent=11 // pred_check
          %p207 = pneg %p118
        $region22: #{tpu_custom_call.1} parent=11 // pred_check_branch
          %209 = sbr.rel (%p207) target = $region24
        $region23: #{tpu_custom_call.1} parent=11 // pred_region
          _
        $region24: #{tpu_custom_call.1} parent=11 // pred_fallthru
          _
        // Predicated region
        $region25: #{tpu_custom_call.1} parent=11 // pred_check
          %p210 = pneg %p139
        $region26: #{tpu_custom_call.1} parent=11 // pred_check_branch
          %212 = sbr.rel (%p210) target = $region28
        $region27: #{tpu_custom_call.1} parent=11 // pred_region
          _
        $region28: #{tpu_custom_call.1} parent=11 // pred_fallthru
          _
        // Predicated region
        $region29: #{tpu_custom_call.1} parent=11 // pred_check
          %p213 = pneg %p160
        $region30: #{tpu_custom_call.1} parent=11 // pred_check_branch
          %215 = sbr.rel (%p213) target = $region32
        $region31: #{tpu_custom_call.1} parent=11 // pred_region
          _
        $region32: #{tpu_custom_call.1} parent=11 // pred_fallthru
          _
      $region12: #{tpu_custom_call.1} parent=5 // pred_fallthru
        _
      %p216 = scmp.lt.s32.totalorder %s15, 2
      // Predicated region
      $region33: #{tpu_custom_call.1} parent=5 // pred_check
        %p217 = pneg %p216
      $region34: #{tpu_custom_call.1} parent=5 // pred_check_branch
        %219 = sbr.rel (%p217) target = $region36
      $region35: #{tpu_custom_call.1} parent=5 // pred_region
        // Predicated region
        $region37: #{tpu_custom_call.1} parent=35 // pred_check
          %p220 = pneg %p49
        $region38: #{tpu_custom_call.1} parent=35 // pred_check_branch
          %222 = sbr.rel (%p220) target = $region40
        $region39: #{tpu_custom_call.1} parent=35 // pred_region
          %s223 = sadd.s32 %s22, %s23
          %s224 = smul.u32 4, %s223
          %p225 = scmp.lt.s32.totalorder %s224, 7
          %s226 = scalar_select %p225, %s224, 7
          %s227 = smul.addr %s226, 2
          %s228 = smul.addr %s227, 8
          %s229 = scalar_lea.vmem %s0, %s228
          %s230 = sadd.s32 %s22, %s23
          %s231 = smul.u32 4, %s230
        $region40: #{tpu_custom_call.1} parent=35 // pred_fallthru
          _
      $region36: #{tpu_custom_call.1} parent=5 // pred_fallthru
        _
      %p232 = scmp.le.s32.totalorder 1, %s15
      %p233 = scmp.lt.s32.totalorder %s15, 3
      %p234 = pnand %p232, %p233
      %p235 = pneg %p234
      // Predicated region
      $region41: #{tpu_custom_call.1} parent=5 // pred_check
        _
      $region42: #{tpu_custom_call.1} parent=5 // pred_check_branch
        %237 = sbr.rel (%p234) target = $region44
      $region43: #{tpu_custom_call.1} parent=5 // pred_region
        %s238 = ssub.s32 %s15, 1
        %s239 = sadd.s32 %s24, %s25
        %s240 = smul.u32 4, %s239
        %p241 = scmp.lt.s32.totalorder %s240, 7
        %s242 = scalar_select %p241, %s240, 7
        %s243 = smul.addr %s242, 2
        %s244 = smul.addr %s243, 8
        %s245 = scalar_lea.vmem %s0, %s244
        %p246 = pneg %p55
        %p247 = pneg %p52
        %p248 = pneg %p76
        %p249 = pneg %p73
        %p250 = pneg %p97
        %p251 = pneg %p94
        %p252 = pneg %p118
        %p253 = pneg %p115
        %p254 = pneg %p139
        %p255 = pneg %p136
        %p256 = pneg %p160
        %p257 = pneg %p157
        %p258 = pneg %p186
        %p259 = pneg %p183
        %s260 = sand.u32 %s173, 1
        %s261 = scalar_lea.sflag [#allocation5], %s260
        %s262 = sand.u32 %s173, 1
        %s263 = scalar_lea.vmem [#allocation4], %s262
        %s264 = sadd.s32 %s24, %s25
        %s265 = smul.u32 4, %s264
        %p266 = scmp.lt.s32.totalorder %s265, 7
        %s267 = scalar_select %p266, %s265, 7
        %s268 = smul.addr %s267, 2
        %s269 = smul.addr %s268, 8
        %s270 = scalar_lea.vmem %s0, %s269
        %s271 = sadd.s32 %s24, %s25
        %s272 = smul.u32 4, %s271
        %v273 = vld [vmem:[%s270] sm:$0xff]
        %v274 = vadd.f32 %v273, 0.0
        %v275 = vld [vmem:[%s270 + $0x8] sm:$0xff]
        %v276 = vadd.f32 %v274, %v275
        %v277 = vmax.f32 %v273, %v275
        %s278 = scalar_lea.vmem %s270, 16
        %v279 = vld [vmem:[%s278] sm:$0xff]
        %v280 = vadd.f32 %v276, %v279
        %v281 = vmax.f32 %v277, %v279
        %v282 = vld [vmem:[%s278 + $0x8] sm:$0xff]
        %v283 = vadd.f32 %v280, %v282
        %v284 = vmax.f32 %v281, %v282
        %s285 = scalar_lea.vmem %s270, 32
        %v286 = vld [vmem:[%s285] sm:$0xff]
        %v287 = vadd.f32 %v283, %v286
        %v288 = vmax.f32 %v284, %v286
        %v289 = vld [vmem:[%s285 + $0x8] sm:$0xff]
        %v290 = vadd.f32 %v287, %v289
        %v291 = vmax.f32 %v288, %v289
        %s292 = scalar_lea.vmem %s270, 48
        %v293 = vld [vmem:[%s292] sm:$0xff]
        %v294 = vadd.f32 %v290, %v293
        %v295 = vmax.f32 %v291, %v293
        %v296 = vld [vmem:[%s292 + $0x8] sm:$0xff]
        %v297 = vadd.f32 %v294, %v296
        %v298 = vmax.f32 %v295, %v296
        %299 = vst [vmem:[#allocation2] sm:$0xff] %v297
        %300 = vst [vmem:[#allocation3] sm:$0xff] %v298
        %p301 = scmp.eq.s32.totalorder %s25, 0
        // Predicated region
        $region45: #{tpu_custom_call.1} parent=43 // pred_check
          %p302 = pneg %p301
        $region46: #{tpu_custom_call.1} parent=43 // pred_check_branch
          %304 = sbr.rel (%p302) target = $region48
        $region47: #{tpu_custom_call.1} parent=43 // pred_region
          %v305 = vld [vmem:[#allocation2] sm:$0xff]
          %306 = vadd.xlane.f32.xlu0 %v305
          %v307 = vpop.xlane.xlu0 %306
          %v308 = vmul.f32 %v307, 0.0009765625
          %v309 = vld [vmem:[#allocation3] sm:$0xff]
          %310 = vmax.xlane.f32.xlu0 %v309
          %v311 = vpop.xlane.xlu0 %310
          %v312 = vld [vmem:[%s1] sm:$0xff]
          %v313 = vld [vmem:[%s1 + $0x8] sm:$0xff]
          %v314 = vld [vmem:[%s1 + $0x10] sm:$0xff]
          %v315 = vld [vmem:[%s1 + $0x18] sm:$0xff]
          %v316 = vld [vmem:[%s2] sm:$0xff]
          %v317 = vld [vmem:[%s2 + $0x8] sm:$0xff]
          %v318 = vld [vmem:[%s2 + $0x10] sm:$0xff]
          %v319 = vld [vmem:[%s2 + $0x18] sm:$0xff]
          %320 = vxpose.xlu0.b32.start [1/16] %v311, 128
          %321 = vxpose.xlu0.b32.cont [2/16] 0.0, 128
          %322 = vxpose.xlu0.b32.cont [3/16] 0.0, 128
          %323 = vxpose.xlu0.b32.cont [4/16] 0.0, 128
          %324 = vxpose.xlu0.b32.cont [5/16] 0.0, 128
          %325 = vxpose.xlu0.b32.cont [6/16] 0.0, 128
          %326 = vxpose.xlu0.b32.cont [7/16] 0.0, 128
          %327 = vxpose.xlu0.b32.cont [8/16] 0.0, 128
          %328 = vxpose.xlu0.b32.cont [9/16] 0.0, 128
          %329 = vxpose.xlu0.b32.cont [10/16] 0.0, 128
          %330 = vxpose.xlu0.b32.cont [11/16] 0.0, 128
          %331 = vxpose.xlu0.b32.cont [12/16] 0.0, 128
          %332 = vxpose.xlu0.b32.cont [13/16] 0.0, 128
          %333 = vxpose.xlu0.b32.cont [14/16] 0.0, 128
          %334 = vxpose.xlu0.b32.cont [15/16] 0.0, 128
          %335 = vxpose.xlu0.b32.end [16/16] 0.0, 128
          %v336 = vpop.trf.xlu0
          %v337 = vpop.trf.xlu0
          %v338 = vpop.trf.xlu0
          %v339 = vpop.trf.xlu0
          %v340 = vpop.trf.xlu0
          %v341 = vpop.trf.xlu0
          %v342 = vpop.trf.xlu0
          %v343 = vpop.trf.xlu0
          %v344 = vpop.trf.xlu0
          %v345 = vpop.trf.xlu0
          %v346 = vpop.trf.xlu0
          %v347 = vpop.trf.xlu0
          %v348 = vpop.trf.xlu0
          %v349 = vpop.trf.xlu0
          %v350 = vpop.trf.xlu0
          %v351 = vpop.trf.xlu0
          %vm352 = vcmask 64512
          %v354 = vsel %vm352, %v336, 0
          %356 = vmatprep.subr.mxu0 %v317
          %357 = vmatpush1.msra.mxu0 %v316
          %358 = vmatprep.subr.mxu0 0.0
          %359 = vmatpush1.msra.mxu0 0.0
          %360 = vmatprep.subr.mxu0 0.0
          %361 = vmatpush1.msra.mxu0 0.0
          %362 = vmatprep.subr.mxu0 0.0
          %363 = vmatpush1.msra.mxu0 0.0
          %364 = vmatprep.subr.mxu0 0.0
          %365 = vmatpush1.msra.mxu0 0.0
          %366 = vmatprep.subr.mxu0 0.0
          %367 = vmatpush1.msra.mxu0 0.0
          %368 = vmatprep.subr.mxu0 0.0
          %369 = vmatpush1.msra.mxu0 0.0
          %370 = vmatprep.subr.mxu0 0.0
          %371 = vmatpush1.msra.mxu0 0.0
          %372 = vmatprep.subr.mxu0 0.0
          %373 = vmatpush1.msra.mxu0 0.0
          %374 = vmatprep.subr.mxu0 0.0
          %375 = vmatpush1.msra.mxu0 0.0
          %376 = vmatprep.subr.mxu0 0.0
          %377 = vmatpush1.msra.mxu0 0.0
          %378 = vmatprep.subr.mxu0 0.0
          %379 = vmatpush1.msra.mxu0 0.0
          %380 = vmatprep.subr.mxu0 0.0
          %381 = vmatpush1.msra.mxu0 0.0
          %382 = vmatprep.subr.mxu0 0.0
          %383 = vmatpush1.msra.mxu0 0.0
          %384 = vmatprep.subr.mxu0 0.0
          %385 = vmatpush1.msra.mxu0 0.0
          %386 = vmatprep.subr.mxu0 0.0
          %387 = vmatpush1.msra.mxu0 0.0
          %388 = vmatprep.subr.mxu0 0.0
          %389 = vmatpush1.msra.mxu0 0.0
          %390 = vmatprep.subr.mxu0 0.0
          %391 = vmatpush1.msra.mxu0 0.0
          %392 = vmatprep.subr.mxu0 0.0
          %393 = vmatpush1.msra.mxu0 0.0
          %394 = vmatprep.subr.mxu0 0.0
          %395 = vmatpush1.msra.mxu0 0.0
          %396 = vmatprep.subr.mxu0 0.0
          %397 = vmatpush1.msra.mxu0 0.0
          %398 = vmatprep.subr.mxu0 0.0
          %399 = vmatpush1.msra.mxu0 0.0
          %400 = vmatprep.subr.mxu0 0.0
          %401 = vmatpush1.msra.mxu0 0.0
          %402 = vmatprep.subr.mxu0 0.0
          %403 = vmatpush1.msra.mxu0 0.0
          %404 = vmatprep.subr.mxu0 0.0
          %405 = vmatpush1.msra.mxu0 0.0
          %406 = vmatprep.subr.mxu0 0.0
          %407 = vmatpush1.msra.mxu0 0.0
          %408 = vmatprep.subr.mxu0 0.0
          %409 = vmatpush1.msra.mxu0 0.0
          %410 = vmatprep.subr.mxu0 0.0
          %411 = vmatpush1.msra.mxu0 0.0
          %412 = vmatprep.subr.mxu0 0.0
          %413 = vmatpush1.msra.mxu0 0.0
          %414 = vmatprep.subr.mxu0 0.0
          %415 = vmatpush1.msra.mxu0 0.0
          %416 = vmatprep.subr.mxu0 0.0
          %417 = vmatpush1.msra.mxu0 0.0
          %418 = vmatprep.subr.mxu0 0.0
          %419 = vmatpush1.msra.mxu0 0.0
          %420 = vmatprep.mubr.f32.mxu0 0.0
          %421 = vmatmul.mubr.f32.gmra.mrb[0].mxu0 %v354
          %v422 = vpop.f32.mrb[0].mxu0
          %v423 = vadd.f32 0.0, %v422
          %v424 = vpop.f32.mrb[0].mxu0
          %v425 = vadd.f32 0.0, %v424
          %426 = vdwg.mxu0
          %427 = vmatprep.subr.mxu0 %v319
          %428 = vmatpush1.msra.mxu0 %v318
          %429 = vmatprep.subr.mxu0 0.0
          %430 = vmatpush1.msra.mxu0 0.0
          %431 = vmatprep.subr.mxu0 0.0
          %432 = vmatpush1.msra.mxu0 0.0
          %433 = vmatprep.subr.mxu0 0.0
          %434 = vmatpush1.msra.mxu0 0.0
          %435 = vmatprep.subr.mxu0 0.0
          %436 = vmatpush1.msra.mxu0 0.0
          %437 = vmatprep.subr.mxu0 0.0
          %438 = vmatpush1.msra.mxu0 0.0
          %439 = vmatprep.subr.mxu0 0.0
          %440 = vmatpush1.msra.mxu0 0.0
          %441 = vmatprep.subr.mxu0 0.0
          %442 = vmatpush1.msra.mxu0 0.0
          %443 = vmatprep.subr.mxu0 0.0
          %444 = vmatpush1.msra.mxu0 0.0
          %445 = vmatprep.subr.mxu0 0.0
          %446 = vmatpush1.msra.mxu0 0.0
          %447 = vmatprep.subr.mxu0 0.0
          %448 = vmatpush1.msra.mxu0 0.0
          %449 = vmatprep.subr.mxu0 0.0
          %450 = vmatpush1.msra.mxu0 0.0
          %451 = vmatprep.subr.mxu0 0.0
          %452 = vmatpush1.msra.mxu0 0.0
          %453 = vmatprep.subr.mxu0 0.0
          %454 = vmatpush1.msra.mxu0 0.0
          %455 = vmatprep.subr.mxu0 0.0
          %456 = vmatpush1.msra.mxu0 0.0
          %457 = vmatprep.subr.mxu0 0.0
          %458 = vmatpush1.msra.mxu0 0.0
          %459 = vmatprep.subr.mxu0 0.0
          %460 = vmatpush1.msra.mxu0 0.0
          %461 = vmatprep.subr.mxu0 0.0
          %462 = vmatpush1.msra.mxu0 0.0
          %463 = vmatprep.subr.mxu0 0.0
          %464 = vmatpush1.msra.mxu0 0.0
          %465 = vmatprep.subr.mxu0 0.0
          %466 = vmatpush1.msra.mxu0 0.0
          %467 = vmatprep.subr.mxu0 0.0
          %468 = vmatpush1.msra.mxu0 0.0
          %469 = vmatprep.subr.mxu0 0.0
          %470 = vmatpush1.msra.mxu0 0.0
          %471 = vmatprep.subr.mxu0 0.0
          %472 = vmatpush1.msra.mxu0 0.0
          %473 = vmatprep.subr.mxu0 0.0
          %474 = vmatpush1.msra.mxu0 0.0
          %475 = vmatprep.subr.mxu0 0.0
          %476 = vmatpush1.msra.mxu0 0.0
          %477 = vmatprep.subr.mxu0 0.0
          %478 = vmatpush1.msra.mxu0 0.0
          %479 = vmatprep.subr.mxu0 0.0
          %480 = vmatpush1.msra.mxu0 0.0
          %481 = vmatprep.subr.mxu0 0.0
          %482 = vmatpush1.msra.mxu0 0.0
          %483 = vmatprep.subr.mxu0 0.0
          %484 = vmatpush1.msra.mxu0 0.0
          %485 = vmatprep.subr.mxu0 0.0
          %486 = vmatpush1.msra.mxu0 0.0
          %487 = vmatprep.subr.mxu0 0.0
          %488 = vmatpush1.msra.mxu0 0.0
          %489 = vmatprep.subr.mxu0 0.0
          %490 = vmatpush1.msra.mxu0 0.0
          %491 = vmatprep.mubr.f32.mxu0 0.0
          %492 = vmatmul.mubr.f32.gmra.mrb[0].mxu0 %v354
          %v493 = vpop.f32.mrb[0].mxu0
          %v494 = vadd.f32 0.0, %v493
          %v495 = vpop.f32.mrb[0].mxu0
          %v496 = vadd.f32 0.0, %v495
          %497 = vdwg.mxu0
          %498 = vxpose.xlu0.b32.start [1/16] %v308, 128
          %499 = vxpose.xlu0.b32.cont [2/16] 0.0, 128
          %500 = vxpose.xlu0.b32.cont [3/16] 0.0, 128
          %501 = vxpose.xlu0.b32.cont [4/16] 0.0, 128
          %502 = vxpose.xlu0.b32.cont [5/16] 0.0, 128
          %503 = vxpose.xlu0.b32.cont [6/16] 0.0, 128
          %504 = vxpose.xlu0.b32.cont [7/16] 0.0, 128
          %505 = vxpose.xlu0.b32.cont [8/16] 0.0, 128
          %506 = vxpose.xlu0.b32.cont [9/16] 0.0, 128
          %507 = vxpose.xlu0.b32.cont [10/16] 0.0, 128
          %508 = vxpose.xlu0.b32.cont [11/16] 0.0, 128
          %509 = vxpose.xlu0.b32.cont [12/16] 0.0, 128
          %510 = vxpose.xlu0.b32.cont [13/16] 0.0, 128
          %511 = vxpose.xlu0.b32.cont [14/16] 0.0, 128
          %512 = vxpose.xlu0.b32.cont [15/16] 0.0, 128
          %513 = vxpose.xlu0.b32.end [16/16] 0.0, 128
          %v514 = vpop.trf.xlu0
          %v515 = vpop.trf.xlu0
          %v516 = vpop.trf.xlu0
          %v517 = vpop.trf.xlu0
          %v518 = vpop.trf.xlu0
          %v519 = vpop.trf.xlu0
          %v520 = vpop.trf.xlu0
          %v521 = vpop.trf.xlu0
          %v522 = vpop.trf.xlu0
          %v523 = vpop.trf.xlu0
          %v524 = vpop.trf.xlu0
          %v525 = vpop.trf.xlu0
          %v526 = vpop.trf.xlu0
          %v527 = vpop.trf.xlu0
          %v528 = vpop.trf.xlu0
          %v529 = vpop.trf.xlu0
          %v531 = vsel %vm352, %v514, 0
          %533 = vmatprep.subr.mxu0 %v313
          %534 = vmatpush1.msra.mxu0 %v312
          %535 = vmatprep.subr.mxu0 0.0
          %536 = vmatpush1.msra.mxu0 0.0
          %537 = vmatprep.subr.mxu0 0.0
          %538 = vmatpush1.msra.mxu0 0.0
          %539 = vmatprep.subr.mxu0 0.0
          %540 = vmatpush1.msra.mxu0 0.0
          %541 = vmatprep.subr.mxu0 0.0
          %542 = vmatpush1.msra.mxu0 0.0
          %543 = vmatprep.subr.mxu0 0.0
          %544 = vmatpush1.msra.mxu0 0.0
          %545 = vmatprep.subr.mxu0 0.0
          %546 = vmatpush1.msra.mxu0 0.0
          %547 = vmatprep.subr.mxu0 0.0
          %548 = vmatpush1.msra.mxu0 0.0
          %549 = vmatprep.subr.mxu0 0.0
          %550 = vmatpush1.msra.mxu0 0.0
          %551 = vmatprep.subr.mxu0 0.0
          %552 = vmatpush1.msra.mxu0 0.0
          %553 = vmatprep.subr.mxu0 0.0
          %554 = vmatpush1.msra.mxu0 0.0
          %555 = vmatprep.subr.mxu0 0.0
          %556 = vmatpush1.msra.mxu0 0.0
          %557 = vmatprep.subr.mxu0 0.0
          %558 = vmatpush1.msra.mxu0 0.0
          %559 = vmatprep.subr.mxu0 0.0
          %560 = vmatpush1.msra.mxu0 0.0
          %561 = vmatprep.subr.mxu0 0.0
          %562 = vmatpush1.msra.mxu0 0.0
          %563 = vmatprep.subr.mxu0 0.0
          %564 = vmatpush1.msra.mxu0 0.0
          %565 = vmatprep.subr.mxu0 0.0
          %566 = vmatpush1.msra.mxu0 0.0
          %567 = vmatprep.subr.mxu0 0.0
          %568 = vmatpush1.msra.mxu0 0.0
          %569 = vmatprep.subr.mxu0 0.0
          %570 = vmatpush1.msra.mxu0 0.0
          %571 = vmatprep.subr.mxu0 0.0
          %572 = vmatpush1.msra.mxu0 0.0
          %573 = vmatprep.subr.mxu0 0.0
          %574 = vmatpush1.msra.mxu0 0.0
          %575 = vmatprep.subr.mxu0 0.0
          %576 = vmatpush1.msra.mxu0 0.0
          %577 = vmatprep.subr.mxu0 0.0
          %578 = vmatpush1.msra.mxu0 0.0
          %579 = vmatprep.subr.mxu0 0.0
          %580 = vmatpush1.msra.mxu0 0.0
          %581 = vmatprep.subr.mxu0 0.0
          %582 = vmatpush1.msra.mxu0 0.0
          %583 = vmatprep.subr.mxu0 0.0
          %584 = vmatpush1.msra.mxu0 0.0
          %585 = vmatprep.subr.mxu0 0.0
          %586 = vmatpush1.msra.mxu0 0.0
          %587 = vmatprep.subr.mxu0 0.0
          %588 = vmatpush1.msra.mxu0 0.0
          %589 = vmatprep.subr.mxu0 0.0
          %590 = vmatpush1.msra.mxu0 0.0
          %591 = vmatprep.subr.mxu0 0.0
          %592 = vmatpush1.msra.mxu0 0.0
          %593 = vmatprep.subr.mxu0 0.0
          %594 = vmatpush1.msra.mxu0 0.0
          %595 = vmatprep.subr.mxu0 0.0
          %596 = vmatpush1.msra.mxu0 0.0
          %597 = vmatprep.mubr.f32.mxu0 0.0
          %598 = vmatmul.mubr.f32.gmra.mrb[0].mxu0 %v531
          %v599 = vpop.f32.mrb[0].mxu0
          %v600 = vadd.f32 %v423, %v599
          %v601 = vpop.f32.mrb[0].mxu0
          %v602 = vadd.f32 %v425, %v601
          %603 = vdwg.mxu0
          %604 = vmatprep.subr.mxu0 %v315
          %605 = vmatpush1.msra.mxu0 %v314
          %606 = vmatprep.subr.mxu0 0.0
          %607 = vmatpush1.msra.mxu0 0.0
          %608 = vmatprep.subr.mxu0 0.0
          %609 = vmatpush1.msra.mxu0 0.0
          %610 = vmatprep.subr.mxu0 0.0
          %611 = vmatpush1.msra.mxu0 0.0
          %612 = vmatprep.subr.mxu0 0.0
          %613 = vmatpush1.msra.mxu0 0.0
          %614 = vmatprep.subr.mxu0 0.0
          %615 = vmatpush1.msra.mxu0 0.0
          %616 = vmatprep.subr.mxu0 0.0
          %617 = vmatpush1.msra.mxu0 0.0
          %618 = vmatprep.subr.mxu0 0.0
          %619 = vmatpush1.msra.mxu0 0.0
          %620 = vmatprep.subr.mxu0 0.0
          %621 = vmatpush1.msra.mxu0 0.0
          %622 = vmatprep.subr.mxu0 0.0
          %623 = vmatpush1.msra.mxu0 0.0
          %624 = vmatprep.subr.mxu0 0.0
          %625 = vmatpush1.msra.mxu0 0.0
          %626 = vmatprep.subr.mxu0 0.0
          %627 = vmatpush1.msra.mxu0 0.0
          %628 = vmatprep.subr.mxu0 0.0
          %629 = vmatpush1.msra.mxu0 0.0
          %630 = vmatprep.subr.mxu0 0.0
          %631 = vmatpush1.msra.mxu0 0.0
          %632 = vmatprep.subr.mxu0 0.0
          %633 = vmatpush1.msra.mxu0 0.0
          %634 = vmatprep.subr.mxu0 0.0
          %635 = vmatpush1.msra.mxu0 0.0
          %636 = vmatprep.subr.mxu0 0.0
          %637 = vmatpush1.msra.mxu0 0.0
          %638 = vmatprep.subr.mxu0 0.0
          %639 = vmatpush1.msra.mxu0 0.0
          %640 = vmatprep.subr.mxu0 0.0
          %641 = vmatpush1.msra.mxu0 0.0
          %642 = vmatprep.subr.mxu0 0.0
          %643 = vmatpush1.msra.mxu0 0.0
          %644 = vmatprep.subr.mxu0 0.0
          %645 = vmatpush1.msra.mxu0 0.0
          %646 = vmatprep.subr.mxu0 0.0
          %647 = vmatpush1.msra.mxu0 0.0
          %648 = vmatprep.subr.mxu0 0.0
          %649 = vmatpush1.msra.mxu0 0.0
          %650 = vmatprep.subr.mxu0 0.0
          %651 = vmatpush1.msra.mxu0 0.0
          %652 = vmatprep.subr.mxu0 0.0
          %653 = vmatpush1.msra.mxu0 0.0
          %654 = vmatprep.subr.mxu0 0.0
          %655 = vmatpush1.msra.mxu0 0.0
          %656 = vmatprep.subr.mxu0 0.0
          %657 = vmatpush1.msra.mxu0 0.0
          %658 = vmatprep.subr.mxu0 0.0
          %659 = vmatpush1.msra.mxu0 0.0
          %660 = vmatprep.subr.mxu0 0.0
          %661 = vmatpush1.msra.mxu0 0.0
          %662 = vmatprep.subr.mxu0 0.0
          %663 = vmatpush1.msra.mxu0 0.0
          %664 = vmatprep.subr.mxu0 0.0
          %665 = vmatpush1.msra.mxu0 0.0
          %666 = vmatprep.subr.mxu0 0.0
          %667 = vmatpush1.msra.mxu0 0.0
          %668 = vmatprep.mubr.f32.mxu0 0.0
          %669 = vmatmul.mubr.f32.gmra.mrb[0].mxu0 %v531
          %v670 = vpop.f32.mrb[0].mxu0
          %v671 = vadd.f32 %v494, %v670
          %v672 = vpop.f32.mrb[0].mxu0
          %v673 = vadd.f32 %v496, %v672
          %674 = vdwg.mxu0
          %v675 = vld [vmem:[%s3] sm:$0xf]
          %v677 = vlaneseq
          %v678 = vshrl.u32 %v677, 7
          %v679 = vsub.s32 0, %v678
          %v680 = vrot.slane %v675, %v679
          %v681 = vlaneseq
          %v682 = vshrl.u32 %v681, 7
          %v683 = vsub.s32 1, %v682
          %v684 = vrot.slane %v675, %v683
          %v685 = vlaneseq
          %v686 = vshrl.u32 %v685, 7
          %v687 = vsub.s32 2, %v686
          %v688 = vrot.slane %v675, %v687
          %v689 = vlaneseq
          %v690 = vshrl.u32 %v689, 7
          %v691 = vsub.s32 3, %v690
          %v692 = vrot.slane %v675, %v691
          %v697 = vadd.f32 %v600, %v680
          %v698 = vadd.f32 %v602, %v684
          %v699 = vadd.f32 %v671, %v688
          %v700 = vadd.f32 %v673, %v692
          %v701 = vmax.f32 %v697, 0.0
          %v702 = vmax.f32 %v698, 0.0
          %v703 = vmax.f32 %v699, 0.0
          %v704 = vmax.f32 %v700, 0.0
          %vm705 = vcmp.ne.f32.partialorder %v697, %v697
          %vm706 = vcmp.ne.f32.partialorder %v698, %v698
          %vm707 = vcmp.ne.f32.partialorder %v699, %v699
          %vm708 = vcmp.ne.f32.partialorder %v700, %v700
          %v709 = vadd.f32 %v697, 0.0
          %v710 = vadd.f32 %v698, 0.0
          %v711 = vadd.f32 %v699, 0.0
          %v712 = vadd.f32 %v700, 0.0
          %v713 = vand.u32 2147483647, %v697
          %v714 = vand.u32 2147483647, %v698
          %v715 = vand.u32 2147483647, %v699
          %v716 = vand.u32 2147483647, %v700
          %v717 = vsub.f32 0.0, %v713
          %v718 = vsub.f32 0.0, %v714
          %v719 = vsub.f32 0.0, %v715
          %v720 = vsub.f32 0.0, %v716
          %v721 = vmul.f32 %v717, 1.442695
          %v722 = vpow.pop %v721
          %v723 = vmul.f32 %v718, 1.442695
          %v724 = vpow.pop %v723
          %v725 = vmul.f32 %v719, 1.442695
          %v726 = vpow.pop %v725
          %v727 = vmul.f32 %v720, 1.442695
          %v728 = vpow.pop %v727
          %v729 = vadd.f32 %v722, 1.0
          %v730 = vlog2.pop %v729
          %v731 = vmul.f32 %v730, 0.6931472
          %v732 = vmul.f32 -0.5, %v722
          %v733 = vadd.f32 %v732, 1.0
          %v734 = vmul.f32 %v733, %v722
          %v735 = vand.u32 2147483647, %v722
          %vm736 = vcmp.lt.f32.partialorder %v735, 0.0004427343
          %v737 = vsel %vm736, %v734, %v731
          %v738 = vadd.f32 %v724, 1.0
          %v739 = vlog2.pop %v738
          %v740 = vmul.f32 %v739, 0.6931472
          %v741 = vmul.f32 -0.5, %v724
          %v742 = vadd.f32 %v741, 1.0
          %v743 = vmul.f32 %v742, %v724
          %v744 = vand.u32 2147483647, %v724
          %vm745 = vcmp.lt.f32.partialorder %v744, 0.0004427343
          %v746 = vsel %vm745, %v743, %v740
          %v747 = vadd.f32 %v726, 1.0
          %v748 = vlog2.pop %v747
          %v749 = vmul.f32 %v748, 0.6931472
          %v750 = vmul.f32 -0.5, %v726
          %v751 = vadd.f32 %v750, 1.0
          %v752 = vmul.f32 %v751, %v726
          %v753 = vand.u32 2147483647, %v726
          %vm754 = vcmp.lt.f32.partialorder %v753, 0.0004427343
          %v755 = vsel %vm754, %v752, %v749
          %v756 = vadd.f32 %v728, 1.0
          %v757 = vlog2.pop %v756
          %v758 = vmul.f32 %v757, 0.6931472
          %v759 = vmul.f32 -0.5, %v728
          %v760 = vadd.f32 %v759, 1.0
          %v761 = vmul.f32 %v760, %v728
          %v762 = vand.u32 2147483647, %v728
          %vm763 = vcmp.lt.f32.partialorder %v762, 0.0004427343
          %v764 = vsel %vm763, %v761, %v758
          %v765 = vadd.f32 %v701, %v737
          %v766 = vadd.f32 %v702, %v746
          %v767 = vadd.f32 %v703, %v755
          %v768 = vadd.f32 %v704, %v764
          %v769 = vsel %vm705, %v709, %v765
          %v770 = vsel %vm706, %v710, %v766
          %v771 = vsel %vm707, %v711, %v767
          %v772 = vsel %vm708, %v712, %v768
          %v773 = vtanh.pop %v769
          %v774 = vtanh.pop %v770
          %v775 = vtanh.pop %v771
          %v776 = vtanh.pop %v772
          %v777 = vmul.f32 %v697, %v773
          %v778 = vmul.f32 %v698, %v774
          %v779 = vmul.f32 %v699, %v775
          %v780 = vmul.f32 %v700, %v776
          %v781 = vld [vmem:[%s4] sm:$0xff]
          %v782 = vld [vmem:[%s4 + $0x8] sm:$0xff]
          %v783 = vld [vmem:[%s4 + $0x10] sm:$0xff]
          %v784 = vld [vmem:[%s4 + $0x18] sm:$0xff]
          %v785 = vld [vmem:[%s4 + $0x20] sm:$0xff]
          %v786 = vld [vmem:[%s4 + $0x28] sm:$0xff]
          %v787 = vld [vmem:[%s4 + $0x30] sm:$0xff]
          %v788 = vld [vmem:[%s4 + $0x38] sm:$0xff]
          %v789 = vld [vmem:[%s4 + $0x40] sm:$0xff]
          %v790 = vld [vmem:[%s4 + $0x48] sm:$0xff]
          %v791 = vld [vmem:[%s4 + $0x50] sm:$0xff]
          %v792 = vld [vmem:[%s4 + $0x58] sm:$0xff]
          %v793 = vld [vmem:[%s4 + $0x60] sm:$0xff]
          %v794 = vld [vmem:[%s4 + $0x68] sm:$0xff]
          %v795 = vld [vmem:[%s4 + $0x70] sm:$0xff]
          %v796 = vld [vmem:[%s4 + $0x78] sm:$0xff]
          %v797 = vld [vmem:[%s4 + $0x80] sm:$0xff]
          %v798 = vld [vmem:[%s4 + $0x88] sm:$0xff]
          %v799 = vld [vmem:[%s4 + $0x90] sm:$0xff]
          %v800 = vld [vmem:[%s4 + $0x98] sm:$0xff]
          %v801 = vld [vmem:[%s4 + $0xa0] sm:$0xff]
          %v802 = vld [vmem:[%s4 + $0xa8] sm:$0xff]
          %v803 = vld [vmem:[%s4 + $0xb0] sm:$0xff]
          %v804 = vld [vmem:[%s4 + $0xb8] sm:$0xff]
          %v805 = vld [vmem:[%s4 + $0xc0] sm:$0xff]
          %v806 = vld [vmem:[%s4 + $0xc8] sm:$0xff]
          %v807 = vld [vmem:[%s4 + $0xd0] sm:$0xff]
          %v808 = vld [vmem:[%s4 + $0xd8] sm:$0xff]
          %v809 = vld [vmem:[%s4 + $0xe0] sm:$0xff]
          %v810 = vld [vmem:[%s4 + $0xe8] sm:$0xff]
          %v811 = vld [vmem:[%s4 + $0xf0] sm:$0xff]
          %v812 = vld [vmem:[%s4 + $0xf8] sm:$0xff]
          %v813 = vld [vmem:[%s4 + $0x100] sm:$0xff]
          %v814 = vld [vmem:[%s4 + $0x108] sm:$0xff]
          %v815 = vld [vmem:[%s4 + $0x110] sm:$0xff]
          %v816 = vld [vmem:[%s4 + $0x118] sm:$0xff]
          %v817 = vld [vmem:[%s4 + $0x120] sm:$0xff]
          %v818 = vld [vmem:[%s4 + $0x128] sm:$0xff]
          %v819 = vld [vmem:[%s4 + $0x130] sm:$0xff]
          %v820 = vld [vmem:[%s4 + $0x138] sm:$0xff]
          %v821 = vld [vmem:[%s4 + $0x140] sm:$0xff]
          %v822 = vld [vmem:[%s4 + $0x148] sm:$0xff]
          %v823 = vld [vmem:[%s4 + $0x150] sm:$0xff]
          %v824 = vld [vmem:[%s4 + $0x158] sm:$0xff]
          %v825 = vld [vmem:[%s4 + $0x160] sm:$0xff]
          %v826 = vld [vmem:[%s4 + $0x168] sm:$0xff]
          %v827 = vld [vmem:[%s4 + $0x170] sm:$0xff]
          %v828 = vld [vmem:[%s4 + $0x178] sm:$0xff]
          %v829 = vld [vmem:[%s4 + $0x180] sm:$0xff]
          %v830 = vld [vmem:[%s4 + $0x188] sm:$0xff]
          %v831 = vld [vmem:[%s4 + $0x190] sm:$0xff]
          %v832 = vld [vmem:[%s4 + $0x198] sm:$0xff]
          %v833 = vld [vmem:[%s4 + $0x1a0] sm:$0xff]
          %v834 = vld [vmem:[%s4 + $0x1a8] sm:$0xff]
          %v835 = vld [vmem:[%s4 + $0x1b0] sm:$0xff]
          %v836 = vld [vmem:[%s4 + $0x1b8] sm:$0xff]
          %v837 = vld [vmem:[%s4 + $0x1c0] sm:$0xff]
          %v838 = vld [vmem:[%s4 + $0x1c8] sm:$0xff]
          %v839 = vld [vmem:[%s4 + $0x1d0] sm:$0xff]
          %v840 = vld [vmem:[%s4 + $0x1d8] sm:$0xff]
          %v841 = vld [vmem:[%s4 + $0x1e0] sm:$0xff]
          %v842 = vld [vmem:[%s4 + $0x1e8] sm:$0xff]
          %v843 = vld [vmem:[%s4 + $0x1f0] sm:$0xff]
          %v844 = vld [vmem:[%s4 + $0x1f8] sm:$0xff]
          %v845 = vld [vmem:[%s5] sm:$0x1]
          %846 = vmatprep.subr.mxu0 0.0
          %847 = vmatpush1.msra.mxu0 %v781
          %848 = vmatprep.subr.mxu0 0.0
          %849 = vmatpush1.msra.mxu0 %v782
          %850 = vmatprep.subr.mxu0 0.0
          %851 = vmatpush1.msra.mxu0 %v783
          %852 = vmatprep.subr.mxu0 0.0
          %853 = vmatpush1.msra.mxu0 %v784
          %854 = vmatprep.subr.mxu0 0.0
          %855 = vmatpush1.msra.mxu0 %v785
          %856 = vmatprep.subr.mxu0 0.0
          %857 = vmatpush1.msra.mxu0 %v786
          %858 = vmatprep.subr.mxu0 0.0
          %859 = vmatpush1.msra.mxu0 %v787
          %860 = vmatprep.subr.mxu0 0.0
          %861 = vmatpush1.msra.mxu0 %v788
          %862 = vmatprep.subr.mxu0 0.0
          %863 = vmatpush1.msra.mxu0 %v789
          %864 = vmatprep.subr.mxu0 0.0
          %865 = vmatpush1.msra.mxu0 %v790
          %866 = vmatprep.subr.mxu0 0.0
          %867 = vmatpush1.msra.mxu0 %v791
          %868 = vmatprep.subr.mxu0 0.0
          %869 = vmatpush1.msra.mxu0 %v792
          %870 = vmatprep.subr.mxu0 0.0
          %871 = vmatpush1.msra.mxu0 %v793
          %872 = vmatprep.subr.mxu0 0.0
          %873 = vmatpush1.msra.mxu0 %v794
          %874 = vmatprep.subr.mxu0 0.0
          %875 = vmatpush1.msra.mxu0 %v795
          %876 = vmatprep.subr.mxu0 0.0
          %877 = vmatpush1.msra.mxu0 %v796
          %878 = vmatprep.subr.mxu0 0.0
          %879 = vmatpush1.msra.mxu0 %v797
          %880 = vmatprep.subr.mxu0 0.0
          %881 = vmatpush1.msra.mxu0 %v798
          %882 = vmatprep.subr.mxu0 0.0
          %883 = vmatpush1.msra.mxu0 %v799
          %884 = vmatprep.subr.mxu0 0.0
          %885 = vmatpush1.msra.mxu0 %v800
          %886 = vmatprep.subr.mxu0 0.0
          %887 = vmatpush1.msra.mxu0 %v801
          %888 = vmatprep.subr.mxu0 0.0
          %889 = vmatpush1.msra.mxu0 %v802
          %890 = vmatprep.subr.mxu0 0.0
          %891 = vmatpush1.msra.mxu0 %v803
          %892 = vmatprep.subr.mxu0 0.0
          %893 = vmatpush1.msra.mxu0 %v804
          %894 = vmatprep.subr.mxu0 0.0
          %895 = vmatpush1.msra.mxu0 %v805
          %896 = vmatprep.subr.mxu0 0.0
          %897 = vmatpush1.msra.mxu0 %v806
          %898 = vmatprep.subr.mxu0 0.0
          %899 = vmatpush1.msra.mxu0 %v807
          %900 = vmatprep.subr.mxu0 0.0
          %901 = vmatpush1.msra.mxu0 %v808
          %902 = vmatprep.subr.mxu0 0.0
          %903 = vmatpush1.msra.mxu0 %v809
          %904 = vmatprep.subr.mxu0 0.0
          %905 = vmatpush1.msra.mxu0 %v810
          %906 = vmatprep.subr.mxu0 0.0
          %907 = vmatpush1.msra.mxu0 %v811
          %908 = vmatprep.subr.mxu0 0.0
          %909 = vmatpush1.msra.mxu0 %v812
          %910 = vmatprep.mubr.f32.mxu0 %v778
          %911 = vmatmul.mubr.f32.gmra.mrb[0].mxu0 %v777
          %v912 = vpop.f32.mrb[0].mxu0
          %v913 = vadd.f32 %v845, %v912
          %v914 = vpop.f32.mrb[0].mxu0
          %915 = vdwg.mxu0
          %916 = vmatprep.subr.mxu0 0.0
          %917 = vmatpush1.msra.mxu0 %v813
          %918 = vmatprep.subr.mxu0 0.0
          %919 = vmatpush1.msra.mxu0 %v814
          %920 = vmatprep.subr.mxu0 0.0
          %921 = vmatpush1.msra.mxu0 %v815
          %922 = vmatprep.subr.mxu0 0.0
          %923 = vmatpush1.msra.mxu0 %v816
          %924 = vmatprep.subr.mxu0 0.0
          %925 = vmatpush1.msra.mxu0 %v817
          %926 = vmatprep.subr.mxu0 0.0
          %927 = vmatpush1.msra.mxu0 %v818
          %928 = vmatprep.subr.mxu0 0.0
          %929 = vmatpush1.msra.mxu0 %v819
          %930 = vmatprep.subr.mxu0 0.0
          %931 = vmatpush1.msra.mxu0 %v820
          %932 = vmatprep.subr.mxu0 0.0
          %933 = vmatpush1.msra.mxu0 %v821
          %934 = vmatprep.subr.mxu0 0.0
          %935 = vmatpush1.msra.mxu0 %v822
          %936 = vmatprep.subr.mxu0 0.0
          %937 = vmatpush1.msra.mxu0 %v823
          %938 = vmatprep.subr.mxu0 0.0
          %939 = vmatpush1.msra.mxu0 %v824
          %940 = vmatprep.subr.mxu0 0.0
          %941 = vmatpush1.msra.mxu0 %v825
          %942 = vmatprep.subr.mxu0 0.0
          %943 = vmatpush1.msra.mxu0 %v826
          %944 = vmatprep.subr.mxu0 0.0
          %945 = vmatpush1.msra.mxu0 %v827
          %946 = vmatprep.subr.mxu0 0.0
          %947 = vmatpush1.msra.mxu0 %v828
          %948 = vmatprep.subr.mxu0 0.0
          %949 = vmatpush1.msra.mxu0 %v829
          %950 = vmatprep.subr.mxu0 0.0
          %951 = vmatpush1.msra.mxu0 %v830
          %952 = vmatprep.subr.mxu0 0.0
          %953 = vmatpush1.msra.mxu0 %v831
          %954 = vmatprep.subr.mxu0 0.0
          %955 = vmatpush1.msra.mxu0 %v832
          %956 = vmatprep.subr.mxu0 0.0
          %957 = vmatpush1.msra.mxu0 %v833
          %958 = vmatprep.subr.mxu0 0.0
          %959 = vmatpush1.msra.mxu0 %v834
          %960 = vmatprep.subr.mxu0 0.0
          %961 = vmatpush1.msra.mxu0 %v835
          %962 = vmatprep.subr.mxu0 0.0
          %963 = vmatpush1.msra.mxu0 %v836
          %964 = vmatprep.subr.mxu0 0.0
          %965 = vmatpush1.msra.mxu0 %v837
          %966 = vmatprep.subr.mxu0 0.0
          %967 = vmatpush1.msra.mxu0 %v838
          %968 = vmatprep.subr.mxu0 0.0
          %969 = vmatpush1.msra.mxu0 %v839
          %970 = vmatprep.subr.mxu0 0.0
          %971 = vmatpush1.msra.mxu0 %v840
          %972 = vmatprep.subr.mxu0 0.0
          %973 = vmatpush1.msra.mxu0 %v841
          %974 = vmatprep.subr.mxu0 0.0
          %975 = vmatpush1.msra.mxu0 %v842
          %976 = vmatprep.subr.mxu0 0.0
          %977 = vmatpush1.msra.mxu0 %v843
          %978 = vmatprep.subr.mxu0 0.0
          %979 = vmatpush1.msra.mxu0 %v844
          %980 = vmatprep.mubr.f32.mxu0 %v780
          %981 = vmatmul.mubr.f32.gmra.mrb[0].mxu0 %v779
          %v982 = vpop.f32.mrb[0].mxu0
          %v983 = vadd.f32 %v913, %v982
          %v984 = vpop.f32.mrb[0].mxu0
          %985 = vdwg.mxu0
          %vm986 = vcmask 40960
          %987 = vst.msk [vmem:[%s263] sm:$0x1] %vm986, %v983
        $region48: #{tpu_custom_call.1} parent=43 // pred_fallthru
          _
        %s988 = sand.u32 %s173, 1
        %s989 = scalar_lea.sflag [#allocation5], %s988
        %s990 = sand.u32 %s173, 1
        %s991 = scalar_lea.vmem [#allocation4], %s990
        // Predicated region
        $region49: #{tpu_custom_call.1} parent=43 // pred_check
          %p992 = pneg %p183
        $region50: #{tpu_custom_call.1} parent=43 // pred_check_branch
          %994 = sbr.rel (%p992) target = $region52
        $region51: #{tpu_custom_call.1} parent=43 // pred_region
          %s996 = ssub.s32 16, 16
          %997 = vsyncadd %s989, %s996
          %s998 = smul.addr %s24, 16
          %s999 = scalar_lea.hbm %s6, %s998
          %s1001 = sshll.u32 %s991, 4
          %s1002 = int_to_ptr.vmem [resolvable:$true] %s1001
          %1004 = dma.vmem_to_hbm [thread:$0]  %s1002, 16, %s999, %s989
        $region52: #{tpu_custom_call.1} parent=43 // pred_fallthru
          _
      $region44: #{tpu_custom_call.1} parent=5 // pred_fallthru
        _
      %p1005 = scmp.le.s32.totalorder 2, %s15
      // Predicated region
      $region53: #{tpu_custom_call.1} parent=5 // pred_check
        %p1006 = pneg %p1005
      $region54: #{tpu_custom_call.1} parent=5 // pred_check_branch
        %1008 = sbr.rel (%p1006) target = $region56
      $region55: #{tpu_custom_call.1} parent=5 // pred_region
        %s1009 = ssub.s32 %s15, 2
        // Predicated region
        $region57: #{tpu_custom_call.1} parent=55 // pred_check
          %p1010 = pneg %p189
        $region58: #{tpu_custom_call.1} parent=55 // pred_check_branch
          %1012 = sbr.rel (%p1010) target = $region60
        $region59: #{tpu_custom_call.1} parent=55 // pred_region
          %s1013 = sand.u32 %s174, 1
          %s1014 = scalar_lea.sflag [#allocation5], %s1013
          %s1015 = sand.u32 %s174, 1
          %s1016 = scalar_lea.vmem [#allocation4], %s1015
          %1017 = dma.done %s1014, 16
        $region60: #{tpu_custom_call.1} parent=55 // pred_fallthru
          _
      $region56: #{tpu_custom_call.1} parent=5 // pred_fallthru
        _
    $region6: #{tpu_custom_call.1} parent=1 // loop_footer
      %s19 = sadd.s32 1, %s15
    $region7: #{tpu_custom_call.1} parent=1 // loop_footer_branch
      %14 = sbr.rel target = $region3
    $region8: #{tpu_custom_call.1} parent=1 // loop_exit
      _
    %1018 = vsyncpa [#allocation5], 1
    %s1019 = scalar_lea.sflag [#allocation5], 1
    %1020 = vsyncpa %s1019, 1

</llo_original>
